<compile_context>
chip_gen: v7x
topology: tpu7x:2x2x1
jax: 0.10.0
libtpu: 0.0.40
codegen_flags: <defaults>
</compile_context>

<pallas_src>
import functools

import jax
import jax.numpy as jnp
from jax.experimental import pallas as pl
from jax.experimental.pallas import tpu as pltpu


def _round_up(n, m):
    return ((n + m - 1) // m) * m


def _leaky_relu(v):
    # PyTorch nn.LeakyReLU default negative_slope = 0.01
    return jnp.where(v >= 0, v, 0.01 * v)


def _interp_matrix(indices, bands):
    """(bands, K) linear-interpolation matrix for positions sigmoid(indices).

    Column k holds weight (1-frac) at floor(pos_k) and frac at ceil(pos_k).
    sigmoid keeps pos strictly inside (0, bands-1), so the tent function
    max(0, 1 - |band - pos|) reproduces the reference edge handling exactly.
    """
    t = jax.nn.sigmoid(indices.astype(jnp.float32))             # (K,) in (0, 1)
    pos = t * (bands - 1)                                        # (K,)
    grid = jnp.arange(bands, dtype=jnp.float32)[:, None]         # (bands, 1)
    return jnp.maximum(0.0, 1.0 - jnp.abs(grid - pos[None, :]))  # (bands, K)


def _choose_tiling(batch, tile_b_max):
    """Pad batch to a multiple of 128, pick tile_b (multiple of 128) dividing it.

    Largest tile <= tile_b_max, but keep >= 2 tiles whenever padded >= 256 so
    the "parallel" grid axis shards across v7x's two TensorCores.
    """
    padded = _round_up(max(batch, 1), 128)
    nblk = padded // 128
    max_blocks = max(1, min(nblk, max(tile_b_max, 128) // 128))
    best = 1
    for d in range(1, max_blocks + 1):
        if nblk % d:
            continue
        if padded >= 256 and nblk // d < 2:
            continue
        best = d
    return padded, 128 * best


# ----------------------------- kernels ---------------------------------------


def _ann10_tile_kernel_scalar(x_ref, wf_ref, b1_ref, w2_ref, b2_ref,
                              w3r_ref, b3_ref, out_ref):
    """class_size == 1 head; out block is lane-dense (1, tile_b)."""
    # In-kernel cast of the x tile (hides under the MXU); fc1 fused with linterp.
    x = x_ref[...].astype(wf_ref.dtype)
    h = jnp.dot(x, wf_ref[...], preferred_element_type=jnp.float32) + b1_ref[...]
    h = _leaky_relu(h)
    # fc2
    h = jnp.dot(h.astype(w2_ref.dtype), w2_ref[...],
                preferred_element_type=jnp.float32) + b2_ref[...]
    h = _leaky_relu(h)
    # fc3 (single output): f32 broadcast-mul + lane reduction instead of an N=1
    # MXU matmul; stored lane-dense.
    y = jnp.sum(h * w3r_ref[...], axis=-1)                       # (tile_b,)
    y = y.reshape(1, -1) + b3_ref[...]                           # (1, tile_b)
    out_ref[...] = _leaky_relu(y).astype(out_ref.dtype)


def _ann10_tile_kernel_general(x_ref, wf_ref, b1_ref, w2_ref, b2_ref,
                               w3t_ref, b3_ref, out_ref):
    """class_size > 1 head; out block is lane-dense (class_size, tile_b)."""
    x = x_ref[...].astype(wf_ref.dtype)
    h = _leaky_relu(jnp.dot(x, wf_ref[...],
                            preferred_element_type=jnp.float32) + b1_ref[...])
    h = _leaky_relu(jnp.dot(h.astype(w2_ref.dtype), w2_ref[...],
                            preferred_element_type=jnp.float32) + b2_ref[...])
    # fc3 in f32 (tiny contraction); output produced transposed so the batch
    # axis lands on lanes -> unmasked, lane-dense stores.
    y = jnp.einsum("ch,bh->cb", w3t_ref[...], h,
                   preferred_element_type=jnp.float32) + b3_ref[...]
    out_ref[...] = _leaky_relu(y).astype(out_ref.dtype)


# ----------------------------- wrapper ----------------------------------------


@functools.partial(jax.jit, static_argnames=("tile_b_max", "mxu_dtype"))
def ann10_forward(x, indices, w1, b1, w2, b2, w3, b3, *,
                  tile_b_max=2048, mxu_dtype=jnp.bfloat16):
    """ANN10 forward.

    x:       (batch, bands) spectra held by the linterp module (lane axis = bands).
    indices: (K,) raw (pre-sigmoid) learnable index parameter.
    w*:      (in_features, out_features); b*: (out_features,).
    fc1/fc2 run on the MXU in `mxu_dtype` (bf16 default) with f32 accumulation;
    fc3 runs in f32 on both heads.  Pass mxu_dtype=jnp.float32 for (near-)exact.
    """
    batch, bands = x.shape
    h1 = w1.shape[1]
    h2 = w2.shape[1]
    class_size = w3.shape[1]

    # ---- hoisted, grid-invariant work: interp matrix fused into fc1 ----------
    # linterp followed by fc1 is linear:  (x @ W_interp) @ W1 == x @ (W_interp @ W1)
    # Note: fusing in f32 then casting to bf16 rounds slightly differently than
    # running linterp + fc1 separately in bf16; fine at the test tolerance.
    w_interp = _interp_matrix(indices, bands)                    # (bands, K)
    w_f = jnp.dot(w_interp, w1.astype(jnp.float32))              # (bands, h1)

    # ---- batch tiling ---------------------------------------------------------
    padded, tile_b = _choose_tiling(batch, tile_b_max)
    num_tiles = padded // tile_b

    # x keeps its storage dtype (no wrapper-side convert pass); only zero-pad the
    # (at most 127) missing rows so every tile is full.
    if padded != batch:
        x = jnp.pad(x, ((0, padded - batch), (0, 0)))

    w_f_c = w_f.astype(mxu_dtype)
    w2_c = w2.astype(mxu_dtype)
    b1_r = b1.reshape(1, h1).astype(jnp.float32)
    b2_r = b2.reshape(1, h2).astype(jnp.float32)

    def const_spec(arr):
        # Grid-invariant block: kept resident in VMEM, not re-DMA'd per tile.
        return pl.BlockSpec(arr.shape, lambda i: (0, 0))

    x_spec = pl.BlockSpec((tile_b, bands), lambda i: (i, 0))
    cparams = pltpu.CompilerParams(dimension_semantics=("parallel",))

    mxu_itemsize = jnp.dtype(mxu_dtype).itemsize
    flops = 2 * padded * (bands * h1 + h1 * h2 + h2 * class_size)
    bytes_accessed = (padded * bands * x.dtype.itemsize
                      + (bands * h1 + h1 * h2) * mxu_itemsize
                      + (h2 * class_size + h1 + h2 + class_size) * 4
                      + padded * class_size * 4)
    cost = pl.CostEstimate(flops=flops, transcendentals=0,
                           bytes_accessed=bytes_accessed)

    if class_size == 1:
        # fc3 is a VPU/XLU reduction in f32 -> keep w3/b3 in f32 (no precision loss).
        w3_row = w3.reshape(1, h2).astype(jnp.float32)
        b3_r = b3.reshape(1, 1).astype(jnp.float32)
        out = pl.pallas_call(
            _ann10_tile_kernel_scalar,
            out_shape=jax.ShapeDtypeStruct((1, padded), jnp.float32),
            grid=(num_tiles,),
            in_specs=[x_spec, const_spec(w_f_c), const_spec(b1_r),
                      const_spec(w2_c), const_spec(b2_r),
                      const_spec(w3_row), const_spec(b3_r)],
            out_specs=pl.BlockSpec((1, tile_b), lambda i: (0, i)),
            compiler_params=cparams,
            cost_estimate=cost,
        )(x, w_f_c, b1_r, w2_c, b2_r, w3_row, b3_r)
        return out.reshape(-1)[:batch]            # matches soc_hat.reshape(-1)

    # General head: pre-transpose w3 so the kernel emits a (class_size, tile_b)
    # lane-dense output block; f32 fc3 keeps both heads numerically consistent.
    w3_t = jnp.transpose(w3).astype(jnp.float32)                 # (class_size, h2)
    b3_r = b3.reshape(class_size, 1).astype(jnp.float32)
    out = pl.pallas_call(
        _ann10_tile_kernel_general,
        out_shape=jax.ShapeDtypeStruct((class_size, padded), jnp.float32),
        grid=(num_tiles,),
        in_specs=[x_spec, const_spec(w_f_c), const_spec(b1_r),
                  const_spec(w2_c), const_spec(b2_r),
                  const_spec(w3_t), const_spec(b3_r)],
        out_specs=pl.BlockSpec((class_size, tile_b), lambda i: (0, i)),
        compiler_params=cparams,
        cost_estimate=cost,
    )(x, w_f_c, b1_r, w2_c, b2_r, w3_t, b3_r)
    return jnp.transpose(out)[:batch]             # back to (batch, class_size)


# ----------------------------- reference & params ------------------------------


def ann10_reference(x, indices, w1, b1, w2, b2, w3, b3):
    """Pure-JAX f32 reference mirroring the PyTorch module."""
    bands = x.shape[1]
    t = jax.nn.sigmoid(indices)
    pos = t * (bands - 1)
    lo = jnp.floor(pos).astype(jnp.int32)
    hi = jnp.minimum(lo + 1, bands - 1)
    frac = pos - lo.astype(jnp.float32)
    feats = x[:, lo] * (1.0 - frac) + x[:, hi] * frac
    act = lambda v: jnp.where(v >= 0, v, 0.01 * v)
    h = act(feats @ w1 + b1)
    h = act(h @ w2 + b2)
    h = act(h @ w3 + b3)
    return h.reshape(-1) if w3.shape[1] == 1 else h


def _torch_linear_init(key, fan_in, fan_out):
    """U(-1/sqrt(fan_in), 1/sqrt(fan_in)) init (PyTorch-like), stored (in, out)."""
    kw, kb = jax.random.split(key)
    bound = 1.0 / jnp.sqrt(jnp.float32(fan_in))
    w = jax.random.uniform(kw, (fan_in, fan_out), jnp.float32, -bound, bound)
    b = jax.random.uniform(kb, (fan_out,), jnp.float32, -bound, bound)
    return w, b


def make_ann10_params(key, target_size, class_size, bands, structure=(128, 64)):
    # TODO(synk): exact get_points(0.001, 0.99, target_size, 10) grouping not in
    # spec; use an evenly spaced init over K followed by inverse_sigmoid (logit).
    group_size = 10
    K = target_size * group_size
    init_vals = jnp.linspace(0.001, 0.99, K, dtype=jnp.float32)
    indices = -jnp.log(1.0 / init_vals - 1.0)

    dims = [K] + list(structure) + [class_size]
    keys = jax.random.split(key, len(dims) - 1)
    weights = []
    for i in range(len(dims) - 1):
        w, b = _torch_linear_init(keys[i], dims[i], dims[i + 1])
        weights.append((w, b))
    (w1, b1), (w2, b2), (w3, b3) = weights
    return indices, w1, b1, w2, b2, w3, b3


if __name__ == "__main__":
    key = jax.random.PRNGKey(0)

    def run_case(batch, bands, target_size, class_size, sub):
        kx, kp = jax.random.split(jax.random.fold_in(key, sub))
        x = jax.random.uniform(kx, (batch, bands), jnp.float32)
        params = make_ann10_params(kp, target_size, class_size, bands)
        out = ann10_forward(x, *params)
        out = jax.block_until_ready(out)
        ref = ann10_reference(x, *params)
        assert out.shape == ref.shape, (out.shape, ref.shape)
        err = float(jnp.max(jnp.abs(out.astype(jnp.float32) - ref)))
        assert err < 5e-2, f"max abs err {err}"
        return err

    # class_size == 1 (scalar head, lane-dense output), single batch tile
    run_case(batch=2, bands=32, target_size=8, class_size=1, sub=0)
    # class_size == 1, batch=700 -> padded 768, tile_b=384, 2 parallel tiles
    run_case(batch=700, bands=32, target_size=8, class_size=1, sub=1)
    # class_size > 1 (transposed lane-dense output head), single tile
    run_case(batch=5, bands=32, target_size=8, class_size=3, sub=2)
    # class_size > 1, multiple tiles + ragged batch slice-back
    run_case(batch=300, bands=32, target_size=8, class_size=3, sub=3)

    print("KERNEL_OK")
</pallas_src>

<mosaic_0001>
module attributes {stable_mosaic.version = 11 : i64} {
  func.func @_ann10_tile_kernel_scalar(%arg0: i32, %arg1: memref<128x32xf32, #tpu.memory_space<vmem>>, %arg2: memref<32x128xbf16, #tpu.memory_space<vmem>>, %arg3: memref<1x128xf32, #tpu.memory_space<vmem>>, %arg4: memref<128x64xbf16, #tpu.memory_space<vmem>>, %arg5: memref<1x64xf32, #tpu.memory_space<vmem>>, %arg6: memref<1x64xf32, #tpu.memory_space<vmem>>, %arg7: memref<1x1xf32, #tpu.memory_space<vmem>>, %arg8: memref<1x128xf32, #tpu.memory_space<vmem>>) attributes {dimension_semantics = [#tpu.dimension_semantics<parallel>], iteration_bounds = array<i64: 1>, scalar_prefetch = 0 : i64, scratch_operands = 0 : i64, tpu.core_type = #tpu.core_type<tc>, window_params = [{transform_indices = @transform_0, window_bounds = array<i64: 128, 32>}, {pipeline_mode = #tpu.pipeline_mode<synchronous>, transform_indices = @transform_1, window_bounds = array<i64: 32, 128>}, {pipeline_mode = #tpu.pipeline_mode<synchronous>, transform_indices = @transform_2, window_bounds = array<i64: 1, 128>}, {pipeline_mode = #tpu.pipeline_mode<synchronous>, transform_indices = @transform_3, window_bounds = array<i64: 128, 64>}, {pipeline_mode = #tpu.pipeline_mode<synchronous>, transform_indices = @transform_4, window_bounds = array<i64: 1, 64>}, {pipeline_mode = #tpu.pipeline_mode<synchronous>, transform_indices = @transform_5, window_bounds = array<i64: 1, 64>}, {pipeline_mode = #tpu.pipeline_mode<synchronous>, transform_indices = @transform_6, window_bounds = array<i64: 1, 1>}, {transform_indices = @transform_7, window_bounds = array<i64: 1, 128>}]} {
    %c0 = arith.constant 0 : index
    %c0_0 = arith.constant 0 : index
    %0 = vector.load %arg1[%c0, %c0_0] : memref<128x32xf32, #tpu.memory_space<vmem>>, vector<128x32xf32>
    %1 = arith.truncf %0 : vector<128x32xf32> to vector<128x32xbf16>
    %c0_1 = arith.constant 0 : index
    %c0_2 = arith.constant 0 : index
    %2 = vector.load %arg2[%c0_1, %c0_2] : memref<32x128xbf16, #tpu.memory_space<vmem>>, vector<32x128xbf16>
    %cst = arith.constant dense<0.000000e+00> : vector<128x128xf32>
    %3 = tpu.matmul %1, %2, %cst {dimension_numbers = #tpu.dot_dimension_numbers<[1], [0], [0], [1], [0, 0, 1, 1], [], []>} : vector<128x32xbf16>, vector<32x128xbf16>, vector<128x128xf32> -> vector<128x128xf32>
    %c0_3 = arith.constant 0 : index
    %c0_4 = arith.constant 0 : index
    %4 = vector.load %arg3[%c0_3, %c0_4] : memref<1x128xf32, #tpu.memory_space<vmem>>, vector<1x128xf32>
    %5 = vector.broadcast %4 : vector<1x128xf32> to vector<128x128xf32>
    %6 = arith.addf %3, %5 : vector<128x128xf32>
    %cst_5 = arith.constant 0.000000e+00 : f32
    %7 = vector.broadcast %cst_5 : f32 to vector<128x128xf32>
    %8 = arith.cmpf oge, %6, %7 : vector<128x128xf32>
    %cst_6 = arith.constant 0.00999999977 : f32
    %9 = vector.broadcast %cst_6 : f32 to vector<128x128xf32>
    %10 = arith.mulf %9, %6 : vector<128x128xf32>
    %11 = arith.select %8, %6, %10 : vector<128x128xi1>, vector<128x128xf32>
    %12 = arith.truncf %11 : vector<128x128xf32> to vector<128x128xbf16>
    %c0_7 = arith.constant 0 : index
    %c0_8 = arith.constant 0 : index
    %13 = vector.load %arg4[%c0_7, %c0_8] : memref<128x64xbf16, #tpu.memory_space<vmem>>, vector<128x64xbf16>
    %cst_9 = arith.constant dense<0.000000e+00> : vector<128x64xf32>
    %14 = tpu.matmul %12, %13, %cst_9 {dimension_numbers = #tpu.dot_dimension_numbers<[1], [0], [0], [1], [0, 0, 1, 1], [], []>} : vector<128x128xbf16>, vector<128x64xbf16>, vector<128x64xf32> -> vector<128x64xf32>
    %c0_10 = arith.constant 0 : index
    %c0_11 = arith.constant 0 : index
    %15 = vector.load %arg5[%c0_10, %c0_11] : memref<1x64xf32, #tpu.memory_space<vmem>>, vector<1x64xf32>
    %16 = vector.broadcast %15 : vector<1x64xf32> to vector<128x64xf32>
    %17 = arith.addf %14, %16 : vector<128x64xf32>
    %cst_12 = arith.constant 0.000000e+00 : f32
    %18 = vector.broadcast %cst_12 : f32 to vector<128x64xf32>
    %19 = arith.cmpf oge, %17, %18 : vector<128x64xf32>
    %cst_13 = arith.constant 0.00999999977 : f32
    %20 = vector.broadcast %cst_13 : f32 to vector<128x64xf32>
    %21 = arith.mulf %20, %17 : vector<128x64xf32>
    %22 = arith.select %19, %17, %21 : vector<128x64xi1>, vector<128x64xf32>
    %c0_14 = arith.constant 0 : index
    %c0_15 = arith.constant 0 : index
    %23 = vector.load %arg6[%c0_14, %c0_15] : memref<1x64xf32, #tpu.memory_space<vmem>>, vector<1x64xf32>
    %24 = vector.broadcast %23 : vector<1x64xf32> to vector<128x64xf32>
    %25 = arith.mulf %22, %24 : vector<128x64xf32>
    %cst_16 = arith.constant dense<0.000000e+00> : vector<128xf32>
    %26 = vector.multi_reduction <add>, %25, %cst_16 [1] : vector<128x64xf32> to vector<128xf32>
    %27 = vector.shape_cast %26 : vector<128xf32> to vector<1x128xf32>
    %c0_17 = arith.constant 0 : index
    %c0_18 = arith.constant 0 : index
    %28 = vector.load %arg7[%c0_17, %c0_18] : memref<1x1xf32, #tpu.memory_space<vmem>>, vector<1x1xf32>
    %29 = vector.broadcast %28 : vector<1x1xf32> to vector<1x128xf32>
    %30 = arith.addf %27, %29 : vector<1x128xf32>
    %cst_19 = arith.constant 0.000000e+00 : f32
    %31 = vector.broadcast %cst_19 : f32 to vector<1x128xf32>
    %32 = arith.cmpf oge, %30, %31 : vector<1x128xf32>
    %cst_20 = arith.constant 0.00999999977 : f32
    %33 = vector.broadcast %cst_20 : f32 to vector<1x128xf32>
    %34 = arith.mulf %33, %30 : vector<1x128xf32>
    %35 = arith.select %32, %30, %34 : vector<1x128xi1>, vector<1x128xf32>
    %c0_21 = arith.constant 0 : index
    %c0_22 = arith.constant 0 : index
    %36 = vector.load %arg8[%c0_21, %c0_22] : memref<1x128xf32, #tpu.memory_space<vmem>>, vector<1x128xf32>
    tpu.vector_store %arg8[%c0_21, %c0_22], %35 {strides = array<i32>} : memref<1x128xf32, #tpu.memory_space<vmem>>, vector<1x128xf32>,
    return
  }
  func.func @transform_0(%arg0: i32) -> (i32, i32) {
    %c0_i32 = arith.constant 0 : i32
    %c0_i32_0 = arith.constant 0 : i32
    return %arg0, %c0_i32 : i32, i32
  }
  func.func @transform_1(%arg0: i32) -> (i32, i32) {
    %c0_i32 = arith.constant 0 : i32
    %c0_i32_0 = arith.constant 0 : i32
    %c0_i32_1 = arith.constant 0 : i32
    return %c0_i32, %c0_i32_0 : i32, i32
  }
  func.func @transform_2(%arg0: i32) -> (i32, i32) {
    %c0_i32 = arith.constant 0 : i32
    %c0_i32_0 = arith.constant 0 : i32
    %c0_i32_1 = arith.constant 0 : i32
    return %c0_i32, %c0_i32_0 : i32, i32
  }
  func.func @transform_3(%arg0: i32) -> (i32, i32) {
    %c0_i32 = arith.constant 0 : i32
    %c0_i32_0 = arith.constant 0 : i32
    %c0_i32_1 = arith.constant 0 : i32
    return %c0_i32, %c0_i32_0 : i32, i32
  }
  func.func @transform_4(%arg0: i32) -> (i32, i32) {
    %c0_i32 = arith.constant 0 : i32
    %c0_i32_0 = arith.constant 0 : i32
    %c0_i32_1 = arith.constant 0 : i32
    return %c0_i32, %c0_i32_0 : i32, i32
  }
  func.func @transform_5(%arg0: i32) -> (i32, i32) {
    %c0_i32 = arith.constant 0 : i32
    %c0_i32_0 = arith.constant 0 : i32
    %c0_i32_1 = arith.constant 0 : i32
    return %c0_i32, %c0_i32_0 : i32, i32
  }
  func.func @transform_6(%arg0: i32) -> (i32, i32) {
    %c0_i32 = arith.constant 0 : i32
    %c0_i32_0 = arith.constant 0 : i32
    %c0_i32_1 = arith.constant 0 : i32
    return %c0_i32, %c0_i32_0 : i32, i32
  }
  func.func @transform_7(%arg0: i32) -> (i32, i32) {
    %c0_i32 = arith.constant 0 : i32
    %c0_i32_0 = arith.constant 0 : i32
    return %c0_i32, %arg0 : i32, i32
  }
}

</mosaic_0001>

<llo_original>
// kernel: ann10_forward.1
$region0: #{ann10_forward.1}
  #allocation0 [shape = 'u32[]', space=smem, size = 0x4, offset = 0x4, fixed_abs, tag = 'smem constant byte address 0x4 - core index']
  #allocation1 [shape = 'u32[144,128]{1,0:T(1,128)}', space=vmem, size = 0x12000, scoped, tag = 'internal scratch']
  #allocation2 [shape = 'f32[1,1]{1,0:T(1,128)S(1)}', space=vmem, size = 0x200, scoped, tag = 'scoped memory for ann10_forward.1']
  %s0 = inlined_call_operand.vmem [shape: f32[128,32], index: 0, kind: input, shape index: {}]
  %s1 = inlined_call_operand.vmem [shape: bf16[32,128], index: 1, kind: input, shape index: {}]
  %s2 = inlined_call_operand.vmem [shape: f32[1,128], index: 2, kind: input, shape index: {}]
  %s3 = inlined_call_operand.vmem [shape: bf16[128,64], index: 3, kind: input, shape index: {}]
  %s4 = inlined_call_operand.vmem [shape: f32[1,64], index: 4, kind: input, shape index: {}]
  %s5 = inlined_call_operand.vmem [shape: f32[1,64], index: 5, kind: input, shape index: {}]
  %s6 = inlined_call_operand.<no memory space> [shape: f32[1,1], index: 6, kind: input, shape index: {}]
  %s7 = inlined_call_operand.vmem [shape: f32[1,128], index: 7, kind: output, shape index: {}]
  %s8 = sld [smem:[#allocation0]]
  $region38: #{ann10_forward.1} parent=0
    _
  %s10 = ssub.s32 1, %s8
  %s11 = scalar_select 0, %s10, %s8
  %v12 = vstv %s6
  %13 = vst [vmem:[#allocation2] sm:$0x1] %v12
  // Predicated region
  $region2: #{ann10_forward.1} parent=0 // pred_check
    _
  $region3: #{ann10_forward.1} parent=0 // pred_check_branch
    %15 = sbr.rel (0) target = $region5
  $region4: #{ann10_forward.1} parent=0 // pred_region
    _
  $region5: #{ann10_forward.1} parent=0 // pred_fallthru
    _
  // Predicated region
  $region6: #{ann10_forward.1} parent=0 // pred_check
    _
  $region7: #{ann10_forward.1} parent=0 // pred_check_branch
    %17 = sbr.rel (0) target = $region9
  $region8: #{ann10_forward.1} parent=0 // pred_region
    _
  $region9: #{ann10_forward.1} parent=0 // pred_fallthru
    _
  // Predicated region
  $region10: #{ann10_forward.1} parent=0 // pred_check
    _
  $region11: #{ann10_forward.1} parent=0 // pred_check_branch
    %19 = sbr.rel (0) target = $region13
  $region12: #{ann10_forward.1} parent=0 // pred_region
    _
  $region13: #{ann10_forward.1} parent=0 // pred_fallthru
    _
  // Predicated region
  $region14: #{ann10_forward.1} parent=0 // pred_check
    _
  $region15: #{ann10_forward.1} parent=0 // pred_check_branch
    %21 = sbr.rel (0) target = $region17
  $region16: #{ann10_forward.1} parent=0 // pred_region
    _
  $region17: #{ann10_forward.1} parent=0 // pred_fallthru
    _
  // Predicated region
  $region18: #{ann10_forward.1} parent=0 // pred_check
    _
  $region19: #{ann10_forward.1} parent=0 // pred_check_branch
    %23 = sbr.rel (0) target = $region21
  $region20: #{ann10_forward.1} parent=0 // pred_region
    _
  $region21: #{ann10_forward.1} parent=0 // pred_fallthru
    _
  // Predicated region
  $region22: #{ann10_forward.1} parent=0 // pred_check
    _
  $region23: #{ann10_forward.1} parent=0 // pred_check_branch
    %25 = sbr.rel (0) target = $region25
  $region24: #{ann10_forward.1} parent=0 // pred_region
    _
  $region25: #{ann10_forward.1} parent=0 // pred_fallthru
    _
  // Predicated region
  $region26: #{ann10_forward.1} parent=0 // pred_check
    _
  $region27: #{ann10_forward.1} parent=0 // pred_check_branch
    %27 = sbr.rel (0) target = $region29
  $region28: #{ann10_forward.1} parent=0 // pred_region
    _
  $region29: #{ann10_forward.1} parent=0 // pred_fallthru
    _
  %v29 = vld [vmem:[%s0] sm:$0xff]
  %v30 = vld [vmem:[%s0 + $0x8] sm:$0xff]
  %v31 = vld [vmem:[%s0 + $0x10] sm:$0xff]
  %v32 = vld [vmem:[%s0 + $0x18] sm:$0xff]
  %v33 = vld [vmem:[%s0 + $0x20] sm:$0xff]
  %v34 = vld [vmem:[%s0 + $0x28] sm:$0xff]
  %v35 = vld [vmem:[%s0 + $0x30] sm:$0xff]
  %v36 = vld [vmem:[%s0 + $0x38] sm:$0xff]
  %v37 = vld [vmem:[%s0 + $0x40] sm:$0xff]
  %v38 = vld [vmem:[%s0 + $0x48] sm:$0xff]
  %v39 = vld [vmem:[%s0 + $0x50] sm:$0xff]
  %v40 = vld [vmem:[%s0 + $0x58] sm:$0xff]
  %v41 = vld [vmem:[%s0 + $0x60] sm:$0xff]
  %v42 = vld [vmem:[%s0 + $0x68] sm:$0xff]
  %v43 = vld [vmem:[%s0 + $0x70] sm:$0xff]
  %v44 = vld [vmem:[%s0 + $0x78] sm:$0xff]
  %v45 = vpack.c.bf16 %v30, %v29
  %v46 = vpack.c.bf16 %v32, %v31
  %v47 = vpack.c.bf16 %v34, %v33
  %v48 = vpack.c.bf16 %v36, %v35
  %v49 = vpack.c.bf16 %v38, %v37
  %v50 = vpack.c.bf16 %v40, %v39
  %v51 = vpack.c.bf16 %v42, %v41
  %v52 = vpack.c.bf16 %v44, %v43
  %v53 = vld [vmem:[%s1] sm:$0xf]
  %v54 = vld [vmem:[%s1 + $0x4] sm:$0xf]
  %v55 = vld [vmem:[%s1 + $0x8] sm:$0xf]
  %v56 = vld [vmem:[%s1 + $0xc] sm:$0xf]
  %v57 = vld [vmem:[%s2] sm:$0x1]
  %v59 = vlaneseq
  %v60 = vshrl.u32 %v59, 7
  %v61 = vsub.s32 0, %v60
  %v62 = vrot.slane %v57, %v61
  %v68 = vunpack.c.l.b16 %v53
  %v69 = vunpack.c.l.b16 %v54
  %v70 = vunpack.c.l.b16 %v55
  %v71 = vunpack.c.l.b16 %v56
  %v72 = vpack.c.b16 %v69, %v68
  %v73 = vpack.c.b16 %v71, %v70
  %vm76 = vcmask 261120
  %v78 = vsel %vm76, %v45, 0
  %v81 = vsel %vm76, %v46, 0
  %v84 = vsel %vm76, %v47, 0
  %v87 = vsel %vm76, %v48, 0
  %v90 = vsel %vm76, %v49, 0
  %v93 = vsel %vm76, %v50, 0
  %v96 = vsel %vm76, %v51, 0
  %v99 = vsel %vm76, %v52, 0
  %101 = vmatprep.subr.bf16.mxu0 0
  %102 = vmatpush1.bf16.msra.mxu0 %v72
  %103 = vmatprep.subr.bf16.mxu0 0
  %104 = vmatpush1.bf16.msra.mxu0 %v73
  %105 = vmatprep.subr.bf16.mxu0 0
  %106 = vmatpush1.bf16.msra.mxu0 0
  %107 = vmatprep.subr.bf16.mxu0 0
  %108 = vmatpush1.bf16.msra.mxu0 0
  %109 = vmatprep.subr.bf16.mxu0 0
  %110 = vmatpush1.bf16.msra.mxu0 0
  %111 = vmatprep.subr.bf16.mxu0 0
  %112 = vmatpush1.bf16.msra.mxu0 0
  %113 = vmatprep.subr.bf16.mxu0 0
  %114 = vmatpush1.bf16.msra.mxu0 0
  %115 = vmatprep.subr.bf16.mxu0 0
  %116 = vmatpush1.bf16.msra.mxu0 0
  %117 = vmatprep.subr.bf16.mxu0 0
  %118 = vmatpush1.bf16.msra.mxu0 0
  %119 = vmatprep.subr.bf16.mxu0 0
  %120 = vmatpush1.bf16.msra.mxu0 0
  %121 = vmatprep.subr.bf16.mxu0 0
  %122 = vmatpush1.bf16.msra.mxu0 0
  %123 = vmatprep.subr.bf16.mxu0 0
  %124 = vmatpush1.bf16.msra.mxu0 0
  %125 = vmatprep.subr.bf16.mxu0 0
  %126 = vmatpush1.bf16.msra.mxu0 0
  %127 = vmatprep.subr.bf16.mxu0 0
  %128 = vmatpush1.bf16.msra.mxu0 0
  %129 = vmatprep.subr.bf16.mxu0 0
  %130 = vmatpush1.bf16.msra.mxu0 0
  %131 = vmatprep.subr.bf16.mxu0 0
  %132 = vmatpush1.bf16.msra.mxu0 0
  %133 = vmatprep.mubr.bf16.mxu0 0
  %134 = vmatmul.mubr.bf16.gmra.mrb[0].mxu0 %v78
  %v135 = vpop.f32.mrb[0].mxu0
  %v136 = vadd.f32 %v62, %v135
  %v137 = vpop.f32.mrb[0].mxu0
  %v138 = vpop.f32.mrb[0].mxu0
  %v139 = vadd.f32 %v62, %v138
  %v140 = vpop.f32.mrb[0].mxu0
  %141 = vmatprep.mubr.bf16.mxu0 0
  %142 = vmatmul.mubr.bf16.gmra.mrb[0].mxu0 %v81
  %v143 = vpop.f32.mrb[0].mxu0
  %v144 = vadd.f32 %v62, %v143
  %v145 = vpop.f32.mrb[0].mxu0
  %v146 = vpop.f32.mrb[0].mxu0
  %v147 = vadd.f32 %v62, %v146
  %v148 = vpop.f32.mrb[0].mxu0
  %149 = vmatprep.mubr.bf16.mxu0 0
  %150 = vmatmul.mubr.bf16.gmra.mrb[0].mxu0 %v84
  %v151 = vpop.f32.mrb[0].mxu0
  %v152 = vadd.f32 %v62, %v151
  %v153 = vpop.f32.mrb[0].mxu0
  %v154 = vpop.f32.mrb[0].mxu0
  %v155 = vadd.f32 %v62, %v154
  %v156 = vpop.f32.mrb[0].mxu0
  %157 = vmatprep.mubr.bf16.mxu0 0
  %158 = vmatmul.mubr.bf16.gmra.mrb[0].mxu0 %v87
  %v159 = vpop.f32.mrb[0].mxu0
  %v160 = vadd.f32 %v62, %v159
  %v161 = vpop.f32.mrb[0].mxu0
  %v162 = vpop.f32.mrb[0].mxu0
  %v163 = vadd.f32 %v62, %v162
  %v164 = vpop.f32.mrb[0].mxu0
  %165 = vmatprep.mubr.bf16.mxu0 0
  %166 = vmatmul.mubr.bf16.gmra.mrb[0].mxu0 %v90
  %v167 = vpop.f32.mrb[0].mxu0
  %v168 = vadd.f32 %v62, %v167
  %v169 = vpop.f32.mrb[0].mxu0
  %v170 = vpop.f32.mrb[0].mxu0
  %v171 = vadd.f32 %v62, %v170
  %v172 = vpop.f32.mrb[0].mxu0
  %173 = vmatprep.mubr.bf16.mxu0 0
  %174 = vmatmul.mubr.bf16.gmra.mrb[0].mxu0 %v93
  %v175 = vpop.f32.mrb[0].mxu0
  %v176 = vadd.f32 %v62, %v175
  %v177 = vpop.f32.mrb[0].mxu0
  %v178 = vpop.f32.mrb[0].mxu0
  %v179 = vadd.f32 %v62, %v178
  %v180 = vpop.f32.mrb[0].mxu0
  %181 = vmatprep.mubr.bf16.mxu0 0
  %182 = vmatmul.mubr.bf16.gmra.mrb[0].mxu0 %v96
  %v183 = vpop.f32.mrb[0].mxu0
  %v184 = vadd.f32 %v62, %v183
  %v185 = vpop.f32.mrb[0].mxu0
  %v186 = vpop.f32.mrb[0].mxu0
  %v187 = vadd.f32 %v62, %v186
  %v188 = vpop.f32.mrb[0].mxu0
  %189 = vmatprep.mubr.bf16.mxu0 0
  %190 = vmatmul.mubr.bf16.gmra.mrb[0].mxu0 %v99
  %v191 = vpop.f32.mrb[0].mxu0
  %v192 = vadd.f32 %v62, %v191
  %v193 = vpop.f32.mrb[0].mxu0
  %v194 = vpop.f32.mrb[0].mxu0
  %v195 = vadd.f32 %v62, %v194
  %v196 = vpop.f32.mrb[0].mxu0
  %197 = vdwg.mxu0
  %vm198 = vcmp.ge.f32.partialorder %v136, 0.0
  %vm199 = vcmp.ge.f32.partialorder %v139, 0.0
  %vm200 = vcmp.ge.f32.partialorder %v144, 0.0
  %vm201 = vcmp.ge.f32.partialorder %v147, 0.0
  %vm202 = vcmp.ge.f32.partialorder %v152, 0.0
  %vm203 = vcmp.ge.f32.partialorder %v155, 0.0
  %vm204 = vcmp.ge.f32.partialorder %v160, 0.0
  %vm205 = vcmp.ge.f32.partialorder %v163, 0.0
  %vm206 = vcmp.ge.f32.partialorder %v168, 0.0
  %vm207 = vcmp.ge.f32.partialorder %v171, 0.0
  %vm208 = vcmp.ge.f32.partialorder %v176, 0.0
  %vm209 = vcmp.ge.f32.partialorder %v179, 0.0
  %vm210 = vcmp.ge.f32.partialorder %v184, 0.0
  %vm211 = vcmp.ge.f32.partialorder %v187, 0.0
  %vm212 = vcmp.ge.f32.partialorder %v192, 0.0
  %vm213 = vcmp.ge.f32.partialorder %v195, 0.0
  %v214 = vmul.f32 %v136, 0.01
  %v215 = vmul.f32 %v139, 0.01
  %v216 = vmul.f32 %v144, 0.01
  %v217 = vmul.f32 %v147, 0.01
  %v218 = vmul.f32 %v152, 0.01
  %v219 = vmul.f32 %v155, 0.01
  %v220 = vmul.f32 %v160, 0.01
  %v221 = vmul.f32 %v163, 0.01
  %v222 = vmul.f32 %v168, 0.01
  %v223 = vmul.f32 %v171, 0.01
  %v224 = vmul.f32 %v176, 0.01
  %v225 = vmul.f32 %v179, 0.01
  %v226 = vmul.f32 %v184, 0.01
  %v227 = vmul.f32 %v187, 0.01
  %v228 = vmul.f32 %v192, 0.01
  %v229 = vmul.f32 %v195, 0.01
  %v230 = vsel %vm198, %v136, %v214
  %v231 = vsel %vm199, %v139, %v215
  %v232 = vsel %vm200, %v144, %v216
  %v233 = vsel %vm201, %v147, %v217
  %v234 = vsel %vm202, %v152, %v218
  %v235 = vsel %vm203, %v155, %v219
  %v236 = vsel %vm204, %v160, %v220
  %v237 = vsel %vm205, %v163, %v221
  %v238 = vsel %vm206, %v168, %v222
  %v239 = vsel %vm207, %v171, %v223
  %v240 = vsel %vm208, %v176, %v224
  %v241 = vsel %vm209, %v179, %v225
  %v242 = vsel %vm210, %v184, %v226
  %v243 = vsel %vm211, %v187, %v227
  %v244 = vsel %vm212, %v192, %v228
  %v245 = vsel %vm213, %v195, %v229
  %v246 = vpack.c.bf16 %v231, %v230
  %v247 = vpack.c.bf16 %v233, %v232
  %v248 = vpack.c.bf16 %v235, %v234
  %v249 = vpack.c.bf16 %v237, %v236
  %v250 = vpack.c.bf16 %v239, %v238
  %v251 = vpack.c.bf16 %v241, %v240
  %v252 = vpack.c.bf16 %v243, %v242
  %v253 = vpack.c.bf16 %v245, %v244
  %v254 = vld [vmem:[%s3] sm:$0xf]
  %v255 = vld [vmem:[%s3 + $0x4] sm:$0xf]
  %v256 = vld [vmem:[%s3 + $0x8] sm:$0xf]
  %v257 = vld [vmem:[%s3 + $0xc] sm:$0xf]
  %v258 = vld [vmem:[%s3 + $0x10] sm:$0xf]
  %v259 = vld [vmem:[%s3 + $0x14] sm:$0xf]
  %v260 = vld [vmem:[%s3 + $0x18] sm:$0xf]
  %v261 = vld [vmem:[%s3 + $0x1c] sm:$0xf]
  %v262 = vld [vmem:[%s3 + $0x20] sm:$0xf]
  %v263 = vld [vmem:[%s3 + $0x24] sm:$0xf]
  %v264 = vld [vmem:[%s3 + $0x28] sm:$0xf]
  %v265 = vld [vmem:[%s3 + $0x2c] sm:$0xf]
  %v266 = vld [vmem:[%s3 + $0x30] sm:$0xf]
  %v267 = vld [vmem:[%s3 + $0x34] sm:$0xf]
  %v268 = vld [vmem:[%s3 + $0x38] sm:$0xf]
  %v269 = vld [vmem:[%s3 + $0x3c] sm:$0xf]
  %v270 = vld [vmem:[%s4] sm:$0x1]
  %v272 = vlaneseq
  %v273 = vshrl.u32 %v272, 7
  %v274 = vsub.s32 0, %v273
  %v275 = vrot.slane %v270, %v274
  %v293 = vunpack.c.l.b16 %v254
  %v294 = vunpack.c.l.b16 %v255
  %v295 = vunpack.c.l.b16 %v256
  %v296 = vunpack.c.l.b16 %v257
  %v297 = vunpack.c.l.b16 %v258
  %v298 = vunpack.c.l.b16 %v259
  %v299 = vunpack.c.l.b16 %v260
  %v300 = vunpack.c.l.b16 %v261
  %v301 = vunpack.c.l.b16 %v262
  %v302 = vunpack.c.l.b16 %v263
  %v303 = vunpack.c.l.b16 %v264
  %v304 = vunpack.c.l.b16 %v265
  %v305 = vunpack.c.l.b16 %v266
  %v306 = vunpack.c.l.b16 %v267
  %v307 = vunpack.c.l.b16 %v268
  %v308 = vunpack.c.l.b16 %v269
  %v309 = vpack.c.b16 %v294, %v293
  %v310 = vpack.c.b16 %v296, %v295
  %v311 = vpack.c.b16 %v298, %v297
  %v312 = vpack.c.b16 %v300, %v299
  %v313 = vpack.c.b16 %v302, %v301
  %v314 = vpack.c.b16 %v304, %v303
  %v315 = vpack.c.b16 %v306, %v305
  %v316 = vpack.c.b16 %v308, %v307
  %325 = vmatprep.subr.bf16.mxu0 0
  %326 = vmatpush1.bf16.msra.mxu0 %v309
  %327 = vmatprep.subr.bf16.mxu0 0
  %328 = vmatpush1.bf16.msra.mxu0 %v310
  %329 = vmatprep.subr.bf16.mxu0 0
  %330 = vmatpush1.bf16.msra.mxu0 %v311
  %331 = vmatprep.subr.bf16.mxu0 0
  %332 = vmatpush1.bf16.msra.mxu0 %v312
  %333 = vmatprep.subr.bf16.mxu0 0
  %334 = vmatpush1.bf16.msra.mxu0 %v313
  %335 = vmatprep.subr.bf16.mxu0 0
  %336 = vmatpush1.bf16.msra.mxu0 %v314
  %337 = vmatprep.subr.bf16.mxu0 0
  %338 = vmatpush1.bf16.msra.mxu0 %v315
  %339 = vmatprep.subr.bf16.mxu0 0
  %340 = vmatpush1.bf16.msra.mxu0 %v316
  %341 = vmatprep.subr.bf16.mxu0 0
  %342 = vmatpush1.bf16.msra.mxu0 0
  %343 = vmatprep.subr.bf16.mxu0 0
  %344 = vmatpush1.bf16.msra.mxu0 0
  %345 = vmatprep.subr.bf16.mxu0 0
  %346 = vmatpush1.bf16.msra.mxu0 0
  %347 = vmatprep.subr.bf16.mxu0 0
  %348 = vmatpush1.bf16.msra.mxu0 0
  %349 = vmatprep.subr.bf16.mxu0 0
  %350 = vmatpush1.bf16.msra.mxu0 0
  %351 = vmatprep.subr.bf16.mxu0 0
  %352 = vmatpush1.bf16.msra.mxu0 0
  %353 = vmatprep.subr.bf16.mxu0 0
  %354 = vmatpush1.bf16.msra.mxu0 0
  %355 = vmatprep.subr.bf16.mxu0 0
  %356 = vmatpush1.bf16.msra.mxu0 0
  %357 = vmatprep.mubr.bf16.mxu0 0
  %358 = vmatmul.mubr.bf16.gmra.mrb[0].mxu0 %v246
  %v359 = vpop.f32.mrb[0].mxu0
  %v360 = vadd.f32 %v275, %v359
  %v361 = vpop.f32.mrb[0].mxu0
  %v362 = vpop.f32.mrb[0].mxu0
  %v363 = vadd.f32 %v275, %v362
  %v364 = vpop.f32.mrb[0].mxu0
  %365 = vmatprep.mubr.bf16.mxu0 0
  %366 = vmatmul.mubr.bf16.gmra.mrb[0].mxu0 %v247
  %v367 = vpop.f32.mrb[0].mxu0
  %v368 = vadd.f32 %v275, %v367
  %v369 = vpop.f32.mrb[0].mxu0
  %v370 = vpop.f32.mrb[0].mxu0
  %v371 = vadd.f32 %v275, %v370
  %v372 = vpop.f32.mrb[0].mxu0
  %373 = vmatprep.mubr.bf16.mxu0 0
  %374 = vmatmul.mubr.bf16.gmra.mrb[0].mxu0 %v248
  %v375 = vpop.f32.mrb[0].mxu0
  %v376 = vadd.f32 %v275, %v375
  %v377 = vpop.f32.mrb[0].mxu0
  %v378 = vpop.f32.mrb[0].mxu0
  %v379 = vadd.f32 %v275, %v378
  %v380 = vpop.f32.mrb[0].mxu0
  %381 = vmatprep.mubr.bf16.mxu0 0
  %382 = vmatmul.mubr.bf16.gmra.mrb[0].mxu0 %v249
  %v383 = vpop.f32.mrb[0].mxu0
  %v384 = vadd.f32 %v275, %v383
  %v385 = vpop.f32.mrb[0].mxu0
  %v386 = vpop.f32.mrb[0].mxu0
  %v387 = vadd.f32 %v275, %v386
  %v388 = vpop.f32.mrb[0].mxu0
  %389 = vmatprep.mubr.bf16.mxu0 0
  %390 = vmatmul.mubr.bf16.gmra.mrb[0].mxu0 %v250
  %v391 = vpop.f32.mrb[0].mxu0
  %v392 = vadd.f32 %v275, %v391
  %v393 = vpop.f32.mrb[0].mxu0
  %v394 = vpop.f32.mrb[0].mxu0
  %v395 = vadd.f32 %v275, %v394
  %v396 = vpop.f32.mrb[0].mxu0
  %397 = vmatprep.mubr.bf16.mxu0 0
  %398 = vmatmul.mubr.bf16.gmra.mrb[0].mxu0 %v251
  %v399 = vpop.f32.mrb[0].mxu0
  %v400 = vadd.f32 %v275, %v399
  %v401 = vpop.f32.mrb[0].mxu0
  %v402 = vpop.f32.mrb[0].mxu0
  %v403 = vadd.f32 %v275, %v402
  %v404 = vpop.f32.mrb[0].mxu0
  %405 = vmatprep.mubr.bf16.mxu0 0
  %406 = vmatmul.mubr.bf16.gmra.mrb[0].mxu0 %v252
  %v407 = vpop.f32.mrb[0].mxu0
  %v408 = vadd.f32 %v275, %v407
  %v409 = vpop.f32.mrb[0].mxu0
  %v410 = vpop.f32.mrb[0].mxu0
  %v411 = vadd.f32 %v275, %v410
  %v412 = vpop.f32.mrb[0].mxu0
  %413 = vmatprep.mubr.bf16.mxu0 0
  %414 = vmatmul.mubr.bf16.gmra.mrb[0].mxu0 %v253
  %v415 = vpop.f32.mrb[0].mxu0
  %v416 = vadd.f32 %v275, %v415
  %v417 = vpop.f32.mrb[0].mxu0
  %v418 = vpop.f32.mrb[0].mxu0
  %v419 = vadd.f32 %v275, %v418
  %v420 = vpop.f32.mrb[0].mxu0
  %421 = vdwg.mxu0
  %vm422 = vcmp.ge.f32.partialorder %v360, 0.0
  %vm423 = vcmp.ge.f32.partialorder %v363, 0.0
  %vm424 = vcmp.ge.f32.partialorder %v368, 0.0
  %vm425 = vcmp.ge.f32.partialorder %v371, 0.0
  %vm426 = vcmp.ge.f32.partialorder %v376, 0.0
  %vm427 = vcmp.ge.f32.partialorder %v379, 0.0
  %vm428 = vcmp.ge.f32.partialorder %v384, 0.0
  %vm429 = vcmp.ge.f32.partialorder %v387, 0.0
  %vm430 = vcmp.ge.f32.partialorder %v392, 0.0
  %vm431 = vcmp.ge.f32.partialorder %v395, 0.0
  %vm432 = vcmp.ge.f32.partialorder %v400, 0.0
  %vm433 = vcmp.ge.f32.partialorder %v403, 0.0
  %vm434 = vcmp.ge.f32.partialorder %v408, 0.0
  %vm435 = vcmp.ge.f32.partialorder %v411, 0.0
  %vm436 = vcmp.ge.f32.partialorder %v416, 0.0
  %vm437 = vcmp.ge.f32.partialorder %v419, 0.0
  %v438 = vmul.f32 %v360, 0.01
  %v439 = vmul.f32 %v363, 0.01
  %v440 = vmul.f32 %v368, 0.01
  %v441 = vmul.f32 %v371, 0.01
  %v442 = vmul.f32 %v376, 0.01
  %v443 = vmul.f32 %v379, 0.01
  %v444 = vmul.f32 %v384, 0.01
  %v445 = vmul.f32 %v387, 0.01
  %v446 = vmul.f32 %v392, 0.01
  %v447 = vmul.f32 %v395, 0.01
  %v448 = vmul.f32 %v400, 0.01
  %v449 = vmul.f32 %v403, 0.01
  %v450 = vmul.f32 %v408, 0.01
  %v451 = vmul.f32 %v411, 0.01
  %v452 = vmul.f32 %v416, 0.01
  %v453 = vmul.f32 %v419, 0.01
  %v454 = vsel %vm422, %v360, %v438
  %v455 = vsel %vm423, %v363, %v439
  %v456 = vsel %vm424, %v368, %v440
  %v457 = vsel %vm425, %v371, %v441
  %v458 = vsel %vm426, %v376, %v442
  %v459 = vsel %vm427, %v379, %v443
  %v460 = vsel %vm428, %v384, %v444
  %v461 = vsel %vm429, %v387, %v445
  %v462 = vsel %vm430, %v392, %v446
  %v463 = vsel %vm431, %v395, %v447
  %v464 = vsel %vm432, %v400, %v448
  %v465 = vsel %vm433, %v403, %v449
  %v466 = vsel %vm434, %v408, %v450
  %v467 = vsel %vm435, %v411, %v451
  %v468 = vsel %vm436, %v416, %v452
  %v469 = vsel %vm437, %v419, %v453
  %v470 = vld [vmem:[%s5] sm:$0x1]
  %v472 = vlaneseq
  %v473 = vshrl.u32 %v472, 7
  %v474 = vsub.s32 0, %v473
  %v475 = vrot.slane %v470, %v474
  %v477 = vmul.f32 %v454, %v475
  %v478 = vmul.f32 %v455, %v475
  %v479 = vmul.f32 %v456, %v475
  %v480 = vmul.f32 %v457, %v475
  %v481 = vmul.f32 %v458, %v475
  %v482 = vmul.f32 %v459, %v475
  %v483 = vmul.f32 %v460, %v475
  %v484 = vmul.f32 %v461, %v475
  %v485 = vmul.f32 %v462, %v475
  %v486 = vmul.f32 %v463, %v475
  %v487 = vmul.f32 %v464, %v475
  %v488 = vmul.f32 %v465, %v475
  %v489 = vmul.f32 %v466, %v475
  %v490 = vmul.f32 %v467, %v475
  %v491 = vmul.f32 %v468, %v475
  %v492 = vmul.f32 %v469, %v475
  %vm493 = vcmask 523264
  %v494 = vsel %vm493, %v477, 0.0
  %495 = vadd.xlane.f32.xlu0 %v494
  %v496 = vpop.xlane.xlu0 %495
  %v497 = vsel %vm493, %v478, 0.0
  %498 = vadd.xlane.f32.xlu0 %v497
  %v499 = vpop.xlane.xlu0 %498
  %v500 = vsel %vm493, %v479, 0.0
  %501 = vadd.xlane.f32.xlu0 %v500
  %v502 = vpop.xlane.xlu0 %501
  %v503 = vsel %vm493, %v480, 0.0
  %504 = vadd.xlane.f32.xlu0 %v503
  %v505 = vpop.xlane.xlu0 %504
  %v506 = vsel %vm493, %v481, 0.0
  %507 = vadd.xlane.f32.xlu0 %v506
  %v508 = vpop.xlane.xlu0 %507
  %v509 = vsel %vm493, %v482, 0.0
  %510 = vadd.xlane.f32.xlu0 %v509
  %v511 = vpop.xlane.xlu0 %510
  %v512 = vsel %vm493, %v483, 0.0
  %513 = vadd.xlane.f32.xlu0 %v512
  %v514 = vpop.xlane.xlu0 %513
  %v515 = vsel %vm493, %v484, 0.0
  %516 = vadd.xlane.f32.xlu0 %v515
  %v517 = vpop.xlane.xlu0 %516
  %v518 = vsel %vm493, %v485, 0.0
  %519 = vadd.xlane.f32.xlu0 %v518
  %v520 = vpop.xlane.xlu0 %519
  %v521 = vsel %vm493, %v486, 0.0
  %522 = vadd.xlane.f32.xlu0 %v521
  %v523 = vpop.xlane.xlu0 %522
  %v524 = vsel %vm493, %v487, 0.0
  %525 = vadd.xlane.f32.xlu0 %v524
  %v526 = vpop.xlane.xlu0 %525
  %v527 = vsel %vm493, %v488, 0.0
  %528 = vadd.xlane.f32.xlu0 %v527
  %v529 = vpop.xlane.xlu0 %528
  %v530 = vsel %vm493, %v489, 0.0
  %531 = vadd.xlane.f32.xlu0 %v530
  %v532 = vpop.xlane.xlu0 %531
  %v533 = vsel %vm493, %v490, 0.0
  %534 = vadd.xlane.f32.xlu0 %v533
  %v535 = vpop.xlane.xlu0 %534
  %v536 = vsel %vm493, %v491, 0.0
  %537 = vadd.xlane.f32.xlu0 %v536
  %v538 = vpop.xlane.xlu0 %537
  %v539 = vsel %vm493, %v492, 0.0
  %540 = vadd.xlane.f32.xlu0 %v539
  %v541 = vpop.xlane.xlu0 %540
  %v542 = vld [vmem:[#allocation2] sm:$0x1]
  %544 = vset.pattern.permute.xlu0 0
  %545 = vperm.xlu0 %544, %v542
  %v546 = vpop.permute.xlu0 %545
  %v548 = vlaneseq
  %v549 = vshrl.u32 %v548, 7
  %v550 = vsub.s32 0, %v549
  %v551 = vrot.slane %v546, %v550
  %v552 = vadd.f32 %v496, %v551
  %v553 = vadd.f32 %v499, %v551
  %v554 = vadd.f32 %v502, %v551
  %v555 = vadd.f32 %v505, %v551
  %v556 = vadd.f32 %v508, %v551
  %v557 = vadd.f32 %v511, %v551
  %v558 = vadd.f32 %v514, %v551
  %v559 = vadd.f32 %v517, %v551
  %v560 = vadd.f32 %v520, %v551
  %v561 = vadd.f32 %v523, %v551
  %v562 = vadd.f32 %v526, %v551
  %v563 = vadd.f32 %v529, %v551
  %v564 = vadd.f32 %v532, %v551
  %v565 = vadd.f32 %v535, %v551
  %v566 = vadd.f32 %v538, %v551
  %v567 = vadd.f32 %v541, %v551
  %vm568 = vcmp.ge.f32.partialorder %v552, 0.0
  %vm569 = vcmp.ge.f32.partialorder %v553, 0.0
  %vm570 = vcmp.ge.f32.partialorder %v554, 0.0
  %vm571 = vcmp.ge.f32.partialorder %v555, 0.0
  %vm572 = vcmp.ge.f32.partialorder %v556, 0.0
  %vm573 = vcmp.ge.f32.partialorder %v557, 0.0
  %vm574 = vcmp.ge.f32.partialorder %v558, 0.0
  %vm575 = vcmp.ge.f32.partialorder %v559, 0.0
  %vm576 = vcmp.ge.f32.partialorder %v560, 0.0
  %vm577 = vcmp.ge.f32.partialorder %v561, 0.0
  %vm578 = vcmp.ge.f32.partialorder %v562, 0.0
  %vm579 = vcmp.ge.f32.partialorder %v563, 0.0
  %vm580 = vcmp.ge.f32.partialorder %v564, 0.0
  %vm581 = vcmp.ge.f32.partialorder %v565, 0.0
  %vm582 = vcmp.ge.f32.partialorder %v566, 0.0
  %vm583 = vcmp.ge.f32.partialorder %v567, 0.0
  %v584 = vmul.f32 %v552, 0.01
  %v585 = vmul.f32 %v553, 0.01
  %v586 = vmul.f32 %v554, 0.01
  %v587 = vmul.f32 %v555, 0.01
  %v588 = vmul.f32 %v556, 0.01
  %v589 = vmul.f32 %v557, 0.01
  %v590 = vmul.f32 %v558, 0.01
  %v591 = vmul.f32 %v559, 0.01
  %v592 = vmul.f32 %v560, 0.01
  %v593 = vmul.f32 %v561, 0.01
  %v594 = vmul.f32 %v562, 0.01
  %v595 = vmul.f32 %v563, 0.01
  %v596 = vmul.f32 %v564, 0.01
  %v597 = vmul.f32 %v565, 0.01
  %v598 = vmul.f32 %v566, 0.01
  %v599 = vmul.f32 %v567, 0.01
  %v600 = vsel %vm568, %v552, %v584
  %v601 = vsel %vm569, %v553, %v585
  %v602 = vsel %vm570, %v554, %v586
  %v603 = vsel %vm571, %v555, %v587
  %v604 = vsel %vm572, %v556, %v588
  %v605 = vsel %vm573, %v557, %v589
  %v606 = vsel %vm574, %v558, %v590
  %v607 = vsel %vm575, %v559, %v591
  %v608 = vsel %vm576, %v560, %v592
  %v609 = vsel %vm577, %v561, %v593
  %v610 = vsel %vm578, %v562, %v594
  %v611 = vsel %vm579, %v563, %v595
  %v612 = vsel %vm580, %v564, %v596
  %v613 = vsel %vm581, %v565, %v597
  %v614 = vsel %vm582, %v566, %v598
  %v615 = vsel %vm583, %v567, %v599
  %v632 = vlaneseq
  %v633 = vand.u32 %v632, 127
  %v634 = vlaneseq
  %v635 = vshrl.u32 %v634, 7
  %v636 = vsub.s32 %v633, %v635
  %v637 = vrot.slane %v600, %v636
  %v638 = vadd.s32 %v633, 4294967288
  %v639 = vlaneseq
  %v640 = vshrl.u32 %v639, 7
  %v641 = vsub.s32 %v638, %v640
  %v642 = vrot.slane %v601, %v641
  %vm643 = vcmask 130112
  %v644 = vsel %vm643, %v642, %v637
  %v645 = vadd.s32 %v633, 4294967280
  %v646 = vlaneseq
  %v647 = vshrl.u32 %v646, 7
  %v648 = vsub.s32 %v645, %v647
  %v649 = vrot.slane %v602, %v648
  %vm650 = vcmask 195712
  %v651 = vsel %vm650, %v649, %v644
  %v652 = vadd.s32 %v633, 4294967272
  %v653 = vlaneseq
  %v654 = vshrl.u32 %v653, 7
  %v655 = vsub.s32 %v652, %v654
  %v656 = vrot.slane %v603, %v655
  %vm657 = vcmask 261312
  %v658 = vsel %vm657, %v656, %v651
  %v659 = vadd.s32 %v633, 4294967264
  %v660 = vlaneseq
  %v661 = vshrl.u32 %v660, 7
  %v662 = vsub.s32 %v659, %v661
  %v663 = vrot.slane %v604, %v662
  %vm664 = vcmask 326912
  %v665 = vsel %vm664, %v663, %v658
  %v666 = vadd.s32 %v633, 4294967256
  %v667 = vlaneseq
  %v668 = vshrl.u32 %v667, 7
  %v669 = vsub.s32 %v666, %v668
  %v670 = vrot.slane %v605, %v669
  %vm671 = vcmask 392512
  %v672 = vsel %vm671, %v670, %v665
  %v673 = vadd.s32 %v633, 4294967248
  %v674 = vlaneseq
  %v675 = vshrl.u32 %v674, 7
  %v676 = vsub.s32 %v673, %v675
  %v677 = vrot.slane %v606, %v676
  %vm678 = vcmask 458112
  %v679 = vsel %vm678, %v677, %v672
  %v680 = vadd.s32 %v633, 4294967240
  %v681 = vlaneseq
  %v682 = vshrl.u32 %v681, 7
  %v683 = vsub.s32 %v680, %v682
  %v684 = vrot.slane %v607, %v683
  %vm685 = vcmask 523712
  %v686 = vsel %vm685, %v684, %v679
  %v687 = vadd.s32 %v633, 4294967232
  %v688 = vlaneseq
  %v689 = vshrl.u32 %v688, 7
  %v690 = vsub.s32 %v687, %v689
  %v691 = vrot.slane %v608, %v690
  %vm692 = vcmask 589312
  %v693 = vsel %vm692, %v691, %v686
  %v694 = vadd.s32 %v633, 4294967224
  %v695 = vlaneseq
  %v696 = vshrl.u32 %v695, 7
  %v697 = vsub.s32 %v694, %v696
  %v698 = vrot.slane %v609, %v697
  %vm699 = vcmask 654912
  %v700 = vsel %vm699, %v698, %v693
  %v701 = vadd.s32 %v633, 4294967216
  %v702 = vlaneseq
  %v703 = vshrl.u32 %v702, 7
  %v704 = vsub.s32 %v701, %v703
  %v705 = vrot.slane %v610, %v704
  %vm706 = vcmask 720512
  %v707 = vsel %vm706, %v705, %v700
  %v708 = vadd.s32 %v633, 4294967208
  %v709 = vlaneseq
  %v710 = vshrl.u32 %v709, 7
  %v711 = vsub.s32 %v708, %v710
  %v712 = vrot.slane %v611, %v711
  %vm713 = vcmask 786112
  %v714 = vsel %vm713, %v712, %v707
  %v715 = vadd.s32 %v633, 4294967200
  %v716 = vlaneseq
  %v717 = vshrl.u32 %v716, 7
  %v718 = vsub.s32 %v715, %v717
  %v719 = vrot.slane %v612, %v718
  %vm720 = vcmask 851712
  %v721 = vsel %vm720, %v719, %v714
  %v722 = vadd.s32 %v633, 4294967192
  %v723 = vlaneseq
  %v724 = vshrl.u32 %v723, 7
  %v725 = vsub.s32 %v722, %v724
  %v726 = vrot.slane %v613, %v725
  %vm727 = vcmask 917312
  %v728 = vsel %vm727, %v726, %v721
  %v729 = vadd.s32 %v633, 4294967184
  %v730 = vlaneseq
  %v731 = vshrl.u32 %v730, 7
  %v732 = vsub.s32 %v729, %v731
  %v733 = vrot.slane %v614, %v732
  %vm734 = vcmask 982912
  %v735 = vsel %vm734, %v733, %v728
  %v736 = vadd.s32 %v633, 4294967176
  %v737 = vlaneseq
  %v738 = vshrl.u32 %v737, 7
  %v739 = vsub.s32 %v736, %v738
  %v740 = vrot.slane %v615, %v739
  %vm741 = vcmask 1048512
  %v742 = vsel %vm741, %v740, %v735
  %744 = vst [vmem:[%s7] sm:$0x1] %v742
  // Predicated region
  $region30: #{ann10_forward.1} parent=0 // pred_check
    _
  $region31: #{ann10_forward.1} parent=0 // pred_check_branch
    %746 = sbr.rel (0) target = $region33
  $region32: #{ann10_forward.1} parent=0 // pred_region
    _
  $region33: #{ann10_forward.1} parent=0 // pred_fallthru
    _
  // Predicated region
  $region34: #{ann10_forward.1} parent=0 // pred_check
    _
  $region35: #{ann10_forward.1} parent=0 // pred_check_branch
    %748 = sbr.rel (0) target = $region37
  $region36: #{ann10_forward.1} parent=0 // pred_region
    _
  $region37: #{ann10_forward.1} parent=0 // pred_fallthru
    _

</llo_original>
